<compile_context>
chip_gen: v5e
topology: v5e:2x2
jax: 0.10.0
libtpu: 0.0.40
codegen_flags: <defaults>
</compile_context>

<pallas_src>
import functools

import jax
import jax.numpy as jnp
from jax import lax
from jax.experimental import pallas as pl
from jax.experimental.pallas import tpu as pltpu


def _attention_kernel(enc_ref, att2_ref, we_ref, wf_ref, awe_ref, alpha_ref,
                      *, num_pixels):
    # enc_ref:   (BT, Pp, Ep)  bf16  encoder_out tile (P and E zero-padded)
    # att2_ref:  (BT, Ap)      f32   decoder_att(decoder_hidden) + b_enc + b_dec
    # we_ref:    (Ep, Ap)      bf16  encoder_att weight
    # wf_ref:    (1, Ap)       f32   full_att weight as a row
    # awe_ref:   (BT, Ep)      f32   attention-weighted encoding
    # alpha_ref: (BT, Pp)      f32   attention weights (lane-dense over P)
    bt, pp, ep = enc_ref.shape
    ap = we_ref.shape[1]

    enc = enc_ref[...]                                        # (BT, Pp, Ep) bf16

    # encoder_att: one (BT*Pp, Ep) @ (Ep, Ap) MXU matmul, f32 accumulation.
    att1 = jnp.dot(enc.reshape(bt * pp, ep), we_ref[...],
                   preferred_element_type=jnp.float32).reshape(bt, pp, ap)

    # relu(att1 + att2.unsqueeze(1)); att2 (with folded biases) was hoisted to
    # the wrapper so the tiny decoder GEMM is not re-run every grid step.
    h = jnp.maximum(att1 + att2_ref[...][:, None, :], 0.0)    # (BT, Pp, Ap) f32

    # full_att as a VPU multiply + lane reduce (keeps logits lane-dense).
    # Its scalar bias shifts all logits uniformly and cancels in the softmax.
    att = jnp.sum(h * wf_ref[...][None, :, :], axis=-1)       # (BT, Pp) f32

    # Mask padded pixel logits: padded encoder rows give att1 = 0 but
    # att2 + bias is nonzero there, so unmasked padded positions would steal
    # softmax mass.
    if pp > num_pixels:
        pix = lax.broadcasted_iota(jnp.int32, (bt, pp), 1)
        att = jnp.where(pix < num_pixels, att, -1e30)

    # softmax over the pixel dimension (lane axis).
    m = jnp.max(att, axis=-1, keepdims=True)                  # (BT, 1)
    e = jnp.exp(att - m)                                      # (BT, Pp)
    denom = jnp.sum(e, axis=-1, keepdims=True)                # (BT, 1)
    alpha = e * pl.reciprocal(denom, approx=True)             # (BT, Pp)

    # (encoder_out * alpha.unsqueeze(2)).sum(dim=1): VPU multiply + sublane
    # reduction over P (keeps this batched GEMV off the MXU).
    awe = jnp.sum(enc * alpha[:, :, None], axis=1)            # (BT, Ep) f32

    awe_ref[...] = awe.astype(awe_ref.dtype)
    alpha_ref[...] = alpha.astype(alpha_ref.dtype)


def _round_up(x, m):
    return ((x + m - 1) // m) * m


def _pad_axis(x, axis, target):
    pad = target - x.shape[axis]
    if pad == 0:
        return x
    widths = [(0, 0)] * x.ndim
    widths[axis] = (0, pad)
    return jnp.pad(x, widths)


def _tpu_limits():
    """(physical VMEM bytes, TensorCores per chip) with conservative fallbacks."""
    vmem_bytes = 64 * 1024 * 1024   # conservative default (v7x per-core VMEM)
    num_cores = 1                   # v5e / v6e default (single TensorCore)
    try:
        info = pltpu.get_tpu_info()
        for name in ("vmem_capacity_bytes", "vmem_bytes", "vmem_size_bytes"):
            val = getattr(info, name, None)
            if val:
                vmem_bytes = int(val)
                break
        for name in ("num_tensorcores", "tensorcores_per_chip",
                     "num_cores", "cores_per_chip"):
            val = getattr(info, name, None)
            if val:
                num_cores = int(val)
                break
    except Exception:
        pass
    return vmem_bytes, num_cores


def _choose_block_b(B, Pp, Ep, Ap, *, vmem_bytes, num_cores):
    """Batch tile: as large as this generation's VMEM allows (counting the f32
    intermediates, not just the bf16 encoder tile); split across grid steps
    only on multi-TensorCore chips; best-effort MXU M-alignment."""
    per_row = (2 * Pp * Ep * 2            # encoder tile, bf16, double-buffered
               + 2 * Pp * Ap * 4          # att1 / relu(h) f32 live ranges
               + Pp * Ep * 4              # alpha*enc f32 product for awe reduce
               + 2 * Ap * 4               # att2 tile (double-buffered)
               + 2 * Ep * 4 + 2 * Pp * 4)  # awe / alpha output tiles
    # 128 MiB-VMEM chips (v5e/v6e) get a big streaming budget; 64 MiB v7x less.
    budget = (40 if vmem_bytes >= 96 * 1024 * 1024 else 20) * 1024 * 1024
    bt = max(1, min(B, budget // max(per_row, 1)))

    # Only split the batch across grid steps on multi-TensorCore chips (v7x);
    # on single-core chips it just shrinks tiles and adds per-step overhead.
    if num_cores >= 2 and B >= 2:
        bt = min(bt, max(1, B // num_cores))

    # Best-effort: align the main matmul's M = BT*Pp to the MXU height
    # (256 for v6e/v7x, 128 for v5e) while still dividing B; never grow BT.
    for m_align in (256, 128):
        cand = bt
        while cand > 1 and ((cand * Pp) % m_align or B % cand):
            cand -= 1
        if cand >= 1 and (cand * Pp) % m_align == 0 and B % cand == 0:
            bt = cand
            break

    # The 2-D operands (att2/awe/alpha) put BT on the sublane axis, so BT must
    # divide B and be either B itself or a multiple of 8 for clean tiling.
    bt = max(1, min(bt, B))
    def _ok(c):
        return B % c == 0 and (c == B or c % 8 == 0)
    if not _ok(bt):
        down = next((c for c in range(bt, 0, -1) if _ok(c)), None)
        if down is not None:
            bt = down
        else:
            bt = next((c for c in range(bt + 1, B + 1) if _ok(c)), B)
    return bt


def attention_forward(encoder_out, decoder_hidden, params, *, block_b=None):
    """Pallas forward pass mirroring Attention.forward: returns (awe, alpha)."""
    B, P, E = encoder_out.shape
    D = decoder_hidden.shape[1]
    A = params["we"].shape[1]

    # Pad lane / contraction dims to multiples of 128. Zero padding of E and A
    # is exactly output-preserving (padded weight rows/cols are zero); padded
    # pixel rows are masked to -inf inside the kernel before the softmax.
    Ep = _round_up(E, 128)
    Ap = _round_up(A, 128)
    Pp = _round_up(P, 128)

    enc = _pad_axis(_pad_axis(encoder_out, 2, Ep), 1, Pp).astype(jnp.bfloat16)  # (B, Pp, Ep)
    we = _pad_axis(_pad_axis(params["we"], 0, Ep), 1, Ap).astype(jnp.bfloat16)  # (Ep, Ap)
    wf = _pad_axis(params["wf"].reshape(1, A), 1, Ap).astype(jnp.float32)       # (1, Ap)

    # Hoisted tiny decoder GEMM (+ folded encoder/decoder biases), plain XLA f32.
    att2 = (decoder_hidden.astype(jnp.float32) @ params["wd"].astype(jnp.float32)
            + (params["be"] + params["bd"])[0])
    att2 = _pad_axis(att2, 1, Ap).astype(jnp.float32)                           # (B, Ap)
    # params["bf"] (full_att bias) shifts all logits uniformly -> cancels in softmax.

    vmem_bytes, num_cores = _tpu_limits()
    BT = (_choose_block_b(B, Pp, Ep, Ap, vmem_bytes=vmem_bytes, num_cores=num_cores)
          if block_b is None else block_b)
    grid = (B // BT,)

    # Scoped-VMEM budget: single-buffered weights + double-buffered blocks
    # + f32 intermediates, clamped per generation (128 MiB chips vs 64 MiB v7x).
    blk_bytes = (
        Ep * Ap * 2 + Ap * 4                      # we / wf (single-buffered)
        + 2 * (BT * Pp * Ep * 2)                  # encoder tile, bf16, 2 buffers
        + 2 * (BT * Ap * 4)                       # att2 tile
        + 2 * BT * Pp * Ap * 4                    # att1 / h f32 intermediates
        + BT * Pp * Ep * 4                        # alpha*enc f32 product
        + 2 * (BT * Ep * 4 + BT * Pp * 4)         # output tiles
    )
    cap = 96 * 1024 * 1024 if vmem_bytes >= 96 * 1024 * 1024 else 32 * 1024 * 1024
    vmem_limit = int(min(max(blk_bytes + blk_bytes // 4 + (4 << 20),
                             16 * 1024 * 1024), cap))

    in_specs = [
        pl.BlockSpec((BT, Pp, Ep), lambda b: (b, 0, 0)),           # encoder_out
        pl.BlockSpec((BT, Ap), lambda b: (b, 0)),                  # att2 (+bias)
        pl.BlockSpec((Ep, Ap), lambda b: (0, 0),
                     pipeline_mode=pl.Buffered(buffer_count=1)),   # W_enc (invariant)
        pl.BlockSpec((1, Ap), lambda b: (0, 0),
                     pipeline_mode=pl.Buffered(buffer_count=1)),   # W_full (invariant)
    ]
    out_specs = (
        pl.BlockSpec((BT, Ep), lambda b: (b, 0)),                  # awe
        pl.BlockSpec((BT, Pp), lambda b: (b, 0)),                  # alpha (lane-dense P)
    )
    out_shape = (
        jax.ShapeDtypeStruct((B, Ep), jnp.float32),
        jax.ShapeDtypeStruct((B, Pp), jnp.float32),
    )

    awe_p, alpha_p = pl.pallas_call(
        functools.partial(_attention_kernel, num_pixels=P),
        grid=grid,
        in_specs=in_specs,
        out_specs=out_specs,
        out_shape=out_shape,
        compiler_params=pltpu.CompilerParams(
            dimension_semantics=("parallel",),
            vmem_limit_bytes=vmem_limit),
    )(enc, att2, we, wf)

    return awe_p[:, :E], alpha_p[:, :P]


def init_params(key, encoder_dim, decoder_dim, attention_dim):
    """Deterministic nn.Linear-style init; weights stored pre-transposed (in, out)."""
    k = jax.random.split(key, 7)

    def linear(kw, kb, fan_in, fan_out):
        bound = 1.0 / jnp.sqrt(fan_in)
        w = jax.random.uniform(kw, (fan_in, fan_out), jnp.float32, -bound, bound)
        b = jax.random.uniform(kb, (1, fan_out), jnp.float32, -bound, bound)
        return w, b

    we, be = linear(k[0], k[1], encoder_dim, attention_dim)
    wd, bd = linear(k[2], k[3], decoder_dim, attention_dim)
    wf, bf = linear(k[4], k[5], attention_dim, 1)
    return {"we": we, "be": be, "wd": wd, "bd": bd, "wf": wf, "bf": bf}


def attention_reference(encoder_out, decoder_hidden, params):
    """Pure-JAX f32 reference matching the PyTorch module semantics exactly."""
    att1 = encoder_out @ params["we"] + params["be"][0]                # (B, P, A)
    att2 = decoder_hidden @ params["wd"] + params["bd"][0]             # (B, A)
    h = jnp.maximum(att1 + att2[:, None, :], 0.0)                      # (B, P, A)
    att = (h @ params["wf"] + params["bf"][0])[..., 0]                 # (B, P)
    alpha = jax.nn.softmax(att, axis=1)                                # (B, P)
    awe = (encoder_out * alpha[:, :, None]).sum(axis=1)                # (B, E)
    return awe, alpha


if __name__ == "__main__":
    B, P = 2, 16            # batch, num_pixels (e.g. 4x4 feature map, flattened)
    encoder_dim = 32
    decoder_dim = 24
    attention_dim = 40

    key = jax.random.PRNGKey(0)
    k_enc, k_dec, k_par = jax.random.split(key, 3)

    encoder_out = jax.random.normal(k_enc, (B, P, encoder_dim), jnp.float32)
    decoder_hidden = jax.random.normal(k_dec, (B, decoder_dim), jnp.float32)
    params = init_params(k_par, encoder_dim, decoder_dim, attention_dim)

    awe, alpha = attention_forward(encoder_out, decoder_hidden, params)
    awe, alpha = jax.block_until_ready((awe, alpha))

    awe_ref, alpha_ref = attention_reference(encoder_out, decoder_hidden, params)

    assert awe.shape == (B, encoder_dim) and alpha.shape == (B, P)
    # bf16 MXU matmul + approx reciprocal -> loosened tolerances vs f32 reference.
    assert jnp.allclose(awe, awe_ref, atol=2e-2, rtol=2e-2)
    assert jnp.allclose(alpha, alpha_ref, atol=2e-2, rtol=2e-2)

    print("KERNEL_OK")
</pallas_src>

<mosaic_0001>
module attributes {stable_mosaic.version = 11 : i64} {
  func.func @_attention_kernel(%arg0: i32, %arg1: memref<2x128x128xbf16, #tpu.memory_space<vmem>>, %arg2: memref<2x128xf32, #tpu.memory_space<vmem>>, %arg3: memref<128x128xbf16, #tpu.memory_space<vmem>>, %arg4: memref<1x128xf32, #tpu.memory_space<vmem>>, %arg5: memref<2x128xf32, #tpu.memory_space<vmem>>, %arg6: memref<2x128xf32, #tpu.memory_space<vmem>>) attributes {dimension_semantics = [#tpu.dimension_semantics<parallel>], iteration_bounds = array<i64: 1>, scalar_prefetch = 0 : i64, scratch_operands = 0 : i64, tpu.core_type = #tpu.core_type<tc>, window_params = [{transform_indices = @transform_0, window_bounds = array<i64: 2, 128, 128>}, {transform_indices = @transform_1, window_bounds = array<i64: 2, 128>}, {pipeline_mode = #tpu.pipeline_mode<synchronous>, transform_indices = @transform_2, window_bounds = array<i64: 128, 128>}, {pipeline_mode = #tpu.pipeline_mode<synchronous>, transform_indices = @transform_3, window_bounds = array<i64: 1, 128>}, {transform_indices = @transform_4, window_bounds = array<i64: 2, 128>}, {transform_indices = @transform_5, window_bounds = array<i64: 2, 128>}]} {
    %c0 = arith.constant 0 : index
    %c0_0 = arith.constant 0 : index
    %c0_1 = arith.constant 0 : index
    %0 = vector.load %arg1[%c0, %c0_0, %c0_1] : memref<2x128x128xbf16, #tpu.memory_space<vmem>>, vector<2x128x128xbf16>
    %1 = vector.shape_cast %0 : vector<2x128x128xbf16> to vector<256x128xbf16>
    %c0_2 = arith.constant 0 : index
    %c0_3 = arith.constant 0 : index
    %2 = vector.load %arg3[%c0_2, %c0_3] : memref<128x128xbf16, #tpu.memory_space<vmem>>, vector<128x128xbf16>
    %cst = arith.constant dense<0.000000e+00> : vector<256x128xf32>
    %3 = tpu.matmul %1, %2, %cst {dimension_numbers = #tpu.dot_dimension_numbers<[1], [0], [0], [1], [0, 0, 1, 1], [], []>} : vector<256x128xbf16>, vector<128x128xbf16>, vector<256x128xf32> -> vector<256x128xf32>
    %4 = vector.shape_cast %3 : vector<256x128xf32> to vector<2x128x128xf32>
    %c0_4 = arith.constant 0 : index
    %c0_5 = arith.constant 0 : index
    %5 = vector.load %arg2[%c0_4, %c0_5] : memref<2x128xf32, #tpu.memory_space<vmem>>, vector<2x128xf32>
    %6 = vector.shape_cast %5 : vector<2x128xf32> to vector<2x1x128xf32>
    %7 = vector.broadcast %6 : vector<2x1x128xf32> to vector<2x128x128xf32>
    %8 = arith.addf %4, %7 : vector<2x128x128xf32>
    %cst_6 = arith.constant 0.000000e+00 : f32
    %9 = vector.broadcast %cst_6 : f32 to vector<2x128x128xf32>
    %10 = arith.maximumf %8, %9 : vector<2x128x128xf32>
    %c0_7 = arith.constant 0 : index
    %c0_8 = arith.constant 0 : index
    %11 = vector.load %arg4[%c0_7, %c0_8] : memref<1x128xf32, #tpu.memory_space<vmem>>, vector<1x128xf32>
    %12 = vector.shape_cast %11 : vector<1x128xf32> to vector<1x1x128xf32>
    %13 = vector.broadcast %12 : vector<1x1x128xf32> to vector<2x128x128xf32>
    %14 = arith.mulf %10, %13 : vector<2x128x128xf32>
    %cst_9 = arith.constant dense<0.000000e+00> : vector<2x128xf32>
    %15 = vector.multi_reduction <add>, %14, %cst_9 [2] : vector<2x128x128xf32> to vector<2x128xf32>
    %16 = tpu.iota {dimensions = array<i32: 1>} : vector<2x128xi32>
    %c16_i32 = arith.constant 16 : i32
    %17 = vector.broadcast %c16_i32 : i32 to vector<2x128xi32>
    %18 = arith.cmpi slt, %16, %17 : vector<2x128xi32>
    %cst_10 = arith.constant -1.000000e+30 : f32
    %19 = vector.broadcast %cst_10 : f32 to vector<2x128xf32>
    %20 = arith.select %18, %15, %19 : vector<2x128xi1>, vector<2x128xf32>
    %cst_11 = arith.constant dense<0xFF800000> : vector<2xf32>
    %21 = vector.multi_reduction <maximumf>, %20, %cst_11 [1] : vector<2x128xf32> to vector<2xf32>
    %22 = vector.shape_cast %21 : vector<2xf32> to vector<2x1xf32>
    %23 = vector.broadcast %22 : vector<2x1xf32> to vector<2x128xf32>
    %24 = arith.subf %20, %23 : vector<2x128xf32>
    %25 = math.exp %24 : vector<2x128xf32>
    %cst_12 = arith.constant dense<0.000000e+00> : vector<2xf32>
    %26 = vector.multi_reduction <add>, %25, %cst_12 [1] : vector<2x128xf32> to vector<2xf32>
    %27 = vector.shape_cast %26 : vector<2xf32> to vector<2x1xf32>
    %28 = tpu.reciprocal %27 {approx = true} : vector<2x1xf32> -> vector<2x1xf32>
    %29 = vector.broadcast %28 : vector<2x1xf32> to vector<2x128xf32>
    %30 = arith.mulf %25, %29 : vector<2x128xf32>
    %31 = vector.shape_cast %30 : vector<2x128xf32> to vector<2x128x1xf32>
    %32 = arith.extf %0 : vector<2x128x128xbf16> to vector<2x128x128xf32>
    %33 = vector.broadcast %31 : vector<2x128x1xf32> to vector<2x128x128xf32>
    %34 = arith.mulf %32, %33 : vector<2x128x128xf32>
    %cst_13 = arith.constant dense<0.000000e+00> : vector<2x128xf32>
    %35 = vector.multi_reduction <add>, %34, %cst_13 [1] : vector<2x128x128xf32> to vector<2x128xf32>
    %c0_14 = arith.constant 0 : index
    %c0_15 = arith.constant 0 : index
    %36 = vector.load %arg5[%c0_14, %c0_15] : memref<2x128xf32, #tpu.memory_space<vmem>>, vector<2x128xf32>
    tpu.vector_store %arg5[%c0_14, %c0_15], %35 {strides = array<i32>} : memref<2x128xf32, #tpu.memory_space<vmem>>, vector<2x128xf32>,
    %c0_16 = arith.constant 0 : index
    %c0_17 = arith.constant 0 : index
    %37 = vector.load %arg6[%c0_16, %c0_17] : memref<2x128xf32, #tpu.memory_space<vmem>>, vector<2x128xf32>
    tpu.vector_store %arg6[%c0_16, %c0_17], %30 {strides = array<i32>} : memref<2x128xf32, #tpu.memory_space<vmem>>, vector<2x128xf32>,
    return
  }
  func.func @transform_0(%arg0: i32) -> (i32, i32, i32) {
    %c0_i32 = arith.constant 0 : i32
    %c0_i32_0 = arith.constant 0 : i32
    %c0_i32_1 = arith.constant 0 : i32
    return %arg0, %c0_i32, %c0_i32_0 : i32, i32, i32
  }
  func.func @transform_1(%arg0: i32) -> (i32, i32) {
    %c0_i32 = arith.constant 0 : i32
    %c0_i32_0 = arith.constant 0 : i32
    return %arg0, %c0_i32 : i32, i32
  }
  func.func @transform_2(%arg0: i32) -> (i32, i32) {
    %c0_i32 = arith.constant 0 : i32
    %c0_i32_0 = arith.constant 0 : i32
    %c0_i32_1 = arith.constant 0 : i32
    return %c0_i32, %c0_i32_0 : i32, i32
  }
  func.func @transform_3(%arg0: i32) -> (i32, i32) {
    %c0_i32 = arith.constant 0 : i32
    %c0_i32_0 = arith.constant 0 : i32
    %c0_i32_1 = arith.constant 0 : i32
    return %c0_i32, %c0_i32_0 : i32, i32
  }
  func.func @transform_4(%arg0: i32) -> (i32, i32) {
    %c0_i32 = arith.constant 0 : i32
    %c0_i32_0 = arith.constant 0 : i32
    return %arg0, %c0_i32 : i32, i32
  }
  func.func @transform_5(%arg0: i32) -> (i32, i32) {
    %c0_i32 = arith.constant 0 : i32
    %c0_i32_0 = arith.constant 0 : i32
    return %arg0, %c0_i32 : i32, i32
  }
}

</mosaic_0001>

<llo_original>
// kernel: tpu_custom_call.1
$region0: #{tpu_custom_call.1}
  #allocation0 [shape = 'u32[]', space=smem, size = 0x4, offset = 0x4, fixed_abs, tag = 'smem constant byte address 0x4 - core index']
  #allocation1 [shape = 'u32[72,128]{1,0:T(1,128)}', space=vmem, size = 0x9000, scoped, tag = 'internal scratch']
  %s0 = inlined_call_operand.hbm [shape: bf16[2,128,128], index: 0, kind: input, shape index: {}]
  %s1 = inlined_call_operand.hbm [shape: f32[2,128], index: 1, kind: input, shape index: {}]
  %s2 = inlined_call_operand.hbm [shape: bf16[128,128], index: 2, kind: input, shape index: {}]
  %s3 = inlined_call_operand.vmem [shape: f32[1,128], index: 3, kind: input, shape index: {}]
  %s4 = inlined_call_operand.hbm [shape: f32[2,128], index: 4, kind: output, shape index: {0}]
  %s5 = inlined_call_operand.hbm [shape: f32[2,128], index: 5, kind: output, shape index: {1}]
  %6 = xla_tuple %s4, %s5
  %s7 = sld [smem:[#allocation0]]
  $region46: #{tpu_custom_call.1} parent=0
    _
  %s9 = ssub.s32 1, %s7
  %s10 = scalar_select 0, %s9, %s7
  $region1: #{tpu_custom_call.1} parent=0
    #allocation2 [shape = 'u8[65536]{0}', space=vmem, size = 0x10000, scoped, tag = 'input window, operand 0, single buffered']
    #allocation3 [shape = 's32[1]{0}', space=sflag, size = 0x4, scoped, tag = 'scoped memory for tpu_custom_call.1']
    #allocation4 [shape = 's32[1]{0}', space=sflag, size = 0x4, scoped, tag = 'scoped memory for tpu_custom_call.1']
    #allocation5 [shape = 'u8[1024]{0}', space=vmem, size = 0x400, scoped, tag = 'input window, operand 1, single buffered']
    #allocation6 [shape = 's32[1]{0}', space=sflag, size = 0x4, scoped, tag = 'scoped memory for tpu_custom_call.1']
    #allocation7 [shape = 'u8[32768]{0}', space=vmem, size = 0x8000, scoped, tag = 'input window, operand 2, single buffered']
    #allocation8 [shape = 'u8[1024]{0}', space=vmem, size = 0x400, scoped, tag = 'output window, operand 0, single buffered']
    #allocation9 [shape = 'u8[1024]{0}', space=vmem, size = 0x400, scoped, tag = 'output window, operand 1, single buffered']
    #allocation10 [shape = 's32[1]{0}', space=sflag, size = 0x4, scoped, tag = 'scoped memory for tpu_custom_call.1']
    %11 = vsyncpa [#allocation3], 0
    %12 = vsyncpa [#allocation6], 0
    %13 = vsyncpa [#allocation4], 0
    %14 = vsyncpa [#allocation10], 0
    // Predicated region
    $region2: #{tpu_custom_call.1} parent=1 // pred_check
      _
    $region3: #{tpu_custom_call.1} parent=1 // pred_check_branch
      %16 = sbr.rel (0) target = $region5
    $region4: #{tpu_custom_call.1} parent=1 // pred_region
      %18 = vsyncadd [#allocation3], 0
      %s19 = sshll.u32 %s0, 4
      %s20 = int_to_ptr.hbm [resolvable:$true] %s19
      %s21 = sshll.u32 [#allocation2], 4
      %s22 = int_to_ptr.vmem [resolvable:$true] %s21
      %27 = dma.hbm_to_vmem [thread:$0]  %s20, 2048, %s22, [#allocation3], 64, 64, 4
    $region5: #{tpu_custom_call.1} parent=1 // pred_fallthru
      _
    // Predicated region
    $region6: #{tpu_custom_call.1} parent=1 // pred_check
      _
    $region7: #{tpu_custom_call.1} parent=1 // pred_check_branch
      %29 = sbr.rel (0) target = $region9
    $region8: #{tpu_custom_call.1} parent=1 // pred_region
      %31 = vsyncadd [#allocation6], 0
      %s33 = sshll.u32 %s1, 4
      %s34 = int_to_ptr.hbm [resolvable:$true] %s33
      %s35 = sshll.u32 [#allocation5], 4
      %s36 = int_to_ptr.vmem [resolvable:$true] %s35
      %38 = dma.hbm_to_vmem [thread:$0]  %s34, 32, %s36, [#allocation6]
    $region9: #{tpu_custom_call.1} parent=1 // pred_fallthru
      _
    // Predicated region
    $region10: #{tpu_custom_call.1} parent=1 // pred_check
      _
    $region11: #{tpu_custom_call.1} parent=1 // pred_check_branch
      %40 = sbr.rel (0) target = $region13
    $region12: #{tpu_custom_call.1} parent=1 // pred_region
      %42 = vsyncadd [#allocation6], 0
      %s43 = sshll.u32 %s2, 4
      %s44 = int_to_ptr.hbm [resolvable:$true] %s43
      %s45 = sshll.u32 [#allocation7], 4
      %s46 = int_to_ptr.vmem [resolvable:$true] %s45
      %51 = dma.hbm_to_vmem [thread:$0]  %s44, 1024, %s46, [#allocation6], 64, 64, 4
    $region13: #{tpu_custom_call.1} parent=1 // pred_fallthru
      _
    // Predicated region
    $region14: #{tpu_custom_call.1} parent=1 // pred_check
      _
    $region15: #{tpu_custom_call.1} parent=1 // pred_check_branch
      %53 = sbr.rel (0) target = $region17
    $region16: #{tpu_custom_call.1} parent=1 // pred_region
      _
    $region17: #{tpu_custom_call.1} parent=1 // pred_fallthru
      _
    // Predicated region
    $region18: #{tpu_custom_call.1} parent=1 // pred_check
      _
    $region19: #{tpu_custom_call.1} parent=1 // pred_check_branch
      %55 = sbr.rel (0) target = $region21
    $region20: #{tpu_custom_call.1} parent=1 // pred_region
      %57 = dma.done [#allocation3], 2048
    $region21: #{tpu_custom_call.1} parent=1 // pred_fallthru
      _
    // Predicated region
    $region22: #{tpu_custom_call.1} parent=1 // pred_check
      _
    $region23: #{tpu_custom_call.1} parent=1 // pred_check_branch
      %59 = sbr.rel (0) target = $region25
    $region24: #{tpu_custom_call.1} parent=1 // pred_region
      %61 = dma.done [#allocation6], 32
    $region25: #{tpu_custom_call.1} parent=1 // pred_fallthru
      _
    // Predicated region
    $region26: #{tpu_custom_call.1} parent=1 // pred_check
      _
    $region27: #{tpu_custom_call.1} parent=1 // pred_check_branch
      %63 = sbr.rel (0) target = $region29
    $region28: #{tpu_custom_call.1} parent=1 // pred_region
      %65 = dma.done [#allocation6], 1024
    $region29: #{tpu_custom_call.1} parent=1 // pred_fallthru
      _
    %v66 = vld [vmem:[#allocation2] sm:$0xf]
    %v67 = vld [vmem:[#allocation2 + $0x4] sm:$0xf]
    %v68 = vld [vmem:[#allocation2 + $0x8] sm:$0xf]
    %v69 = vld [vmem:[#allocation2 + $0xc] sm:$0xf]
    %v70 = vld [vmem:[#allocation2 + $0x10] sm:$0xf]
    %v71 = vld [vmem:[#allocation2 + $0x14] sm:$0xf]
    %v72 = vld [vmem:[#allocation2 + $0x18] sm:$0xf]
    %v73 = vld [vmem:[#allocation2 + $0x1c] sm:$0xf]
    %v74 = vld [vmem:[#allocation2 + $0x20] sm:$0xf]
    %v75 = vld [vmem:[#allocation2 + $0x24] sm:$0xf]
    %v76 = vld [vmem:[#allocation2 + $0x28] sm:$0xf]
    %v77 = vld [vmem:[#allocation2 + $0x2c] sm:$0xf]
    %v78 = vld [vmem:[#allocation2 + $0x30] sm:$0xf]
    %v79 = vld [vmem:[#allocation2 + $0x34] sm:$0xf]
    %v80 = vld [vmem:[#allocation2 + $0x38] sm:$0xf]
    %v81 = vld [vmem:[#allocation2 + $0x3c] sm:$0xf]
    %v82 = vld [vmem:[#allocation2 + $0x40] sm:$0xf]
    %v83 = vld [vmem:[#allocation2 + $0x44] sm:$0xf]
    %v84 = vld [vmem:[#allocation2 + $0x48] sm:$0xf]
    %v85 = vld [vmem:[#allocation2 + $0x4c] sm:$0xf]
    %v86 = vld [vmem:[#allocation2 + $0x50] sm:$0xf]
    %v87 = vld [vmem:[#allocation2 + $0x54] sm:$0xf]
    %v88 = vld [vmem:[#allocation2 + $0x58] sm:$0xf]
    %v89 = vld [vmem:[#allocation2 + $0x5c] sm:$0xf]
    %v90 = vld [vmem:[#allocation2 + $0x60] sm:$0xf]
    %v91 = vld [vmem:[#allocation2 + $0x64] sm:$0xf]
    %v92 = vld [vmem:[#allocation2 + $0x68] sm:$0xf]
    %v93 = vld [vmem:[#allocation2 + $0x6c] sm:$0xf]
    %v94 = vld [vmem:[#allocation2 + $0x70] sm:$0xf]
    %v95 = vld [vmem:[#allocation2 + $0x74] sm:$0xf]
    %v96 = vld [vmem:[#allocation2 + $0x78] sm:$0xf]
    %v97 = vld [vmem:[#allocation2 + $0x7c] sm:$0xf]
    %v98 = vld [vmem:[#allocation7] sm:$0xf]
    %v99 = vld [vmem:[#allocation7 + $0x4] sm:$0xf]
    %v100 = vld [vmem:[#allocation7 + $0x8] sm:$0xf]
    %v101 = vld [vmem:[#allocation7 + $0xc] sm:$0xf]
    %v102 = vld [vmem:[#allocation7 + $0x10] sm:$0xf]
    %v103 = vld [vmem:[#allocation7 + $0x14] sm:$0xf]
    %v104 = vld [vmem:[#allocation7 + $0x18] sm:$0xf]
    %v105 = vld [vmem:[#allocation7 + $0x1c] sm:$0xf]
    %v106 = vld [vmem:[#allocation7 + $0x20] sm:$0xf]
    %v107 = vld [vmem:[#allocation7 + $0x24] sm:$0xf]
    %v108 = vld [vmem:[#allocation7 + $0x28] sm:$0xf]
    %v109 = vld [vmem:[#allocation7 + $0x2c] sm:$0xf]
    %v110 = vld [vmem:[#allocation7 + $0x30] sm:$0xf]
    %v111 = vld [vmem:[#allocation7 + $0x34] sm:$0xf]
    %v112 = vld [vmem:[#allocation7 + $0x38] sm:$0xf]
    %v113 = vld [vmem:[#allocation7 + $0x3c] sm:$0xf]
    %v146 = vunpack.c.l.b16 %v66
    %v147 = vunpack.c.l.b16 %v67
    %v148 = vunpack.c.l.b16 %v68
    %v149 = vunpack.c.l.b16 %v69
    %v150 = vunpack.c.l.b16 %v70
    %v151 = vunpack.c.l.b16 %v71
    %v152 = vunpack.c.l.b16 %v72
    %v153 = vunpack.c.l.b16 %v73
    %v154 = vunpack.c.l.b16 %v74
    %v155 = vunpack.c.l.b16 %v75
    %v156 = vunpack.c.l.b16 %v76
    %v157 = vunpack.c.l.b16 %v77
    %v158 = vunpack.c.l.b16 %v78
    %v159 = vunpack.c.l.b16 %v79
    %v160 = vunpack.c.l.b16 %v80
    %v161 = vunpack.c.l.b16 %v81
    %v162 = vunpack.c.l.b16 %v82
    %v163 = vunpack.c.l.b16 %v83
    %v164 = vunpack.c.l.b16 %v84
    %v165 = vunpack.c.l.b16 %v85
    %v166 = vunpack.c.l.b16 %v86
    %v167 = vunpack.c.l.b16 %v87
    %v168 = vunpack.c.l.b16 %v88
    %v169 = vunpack.c.l.b16 %v89
    %v170 = vunpack.c.l.b16 %v90
    %v171 = vunpack.c.l.b16 %v91
    %v172 = vunpack.c.l.b16 %v92
    %v173 = vunpack.c.l.b16 %v93
    %v174 = vunpack.c.l.b16 %v94
    %v175 = vunpack.c.l.b16 %v95
    %v176 = vunpack.c.l.b16 %v96
    %v177 = vunpack.c.l.b16 %v97
    %v178 = vpack.c.b16 %v147, %v146
    %v179 = vpack.c.b16 %v149, %v148
    %v180 = vpack.c.b16 %v151, %v150
    %v181 = vpack.c.b16 %v153, %v152
    %v182 = vpack.c.b16 %v155, %v154
    %v183 = vpack.c.b16 %v157, %v156
    %v184 = vpack.c.b16 %v159, %v158
    %v185 = vpack.c.b16 %v161, %v160
    %v186 = vpack.c.b16 %v163, %v162
    %v187 = vpack.c.b16 %v165, %v164
    %v188 = vpack.c.b16 %v167, %v166
    %v189 = vpack.c.b16 %v169, %v168
    %v190 = vpack.c.b16 %v171, %v170
    %v191 = vpack.c.b16 %v173, %v172
    %v192 = vpack.c.b16 %v175, %v174
    %v193 = vpack.c.b16 %v177, %v176
    %v226 = vunpack.c.l.b16 %v98
    %v227 = vunpack.c.l.b16 %v99
    %v228 = vunpack.c.l.b16 %v100
    %v229 = vunpack.c.l.b16 %v101
    %v230 = vunpack.c.l.b16 %v102
    %v231 = vunpack.c.l.b16 %v103
    %v232 = vunpack.c.l.b16 %v104
    %v233 = vunpack.c.l.b16 %v105
    %v234 = vunpack.c.l.b16 %v106
    %v235 = vunpack.c.l.b16 %v107
    %v236 = vunpack.c.l.b16 %v108
    %v237 = vunpack.c.l.b16 %v109
    %v238 = vunpack.c.l.b16 %v110
    %v239 = vunpack.c.l.b16 %v111
    %v240 = vunpack.c.l.b16 %v112
    %v241 = vunpack.c.l.b16 %v113
    %v242 = vpack.c.b16 %v227, %v226
    %v243 = vpack.c.b16 %v229, %v228
    %v244 = vpack.c.b16 %v231, %v230
    %v245 = vpack.c.b16 %v233, %v232
    %v246 = vpack.c.b16 %v235, %v234
    %v247 = vpack.c.b16 %v237, %v236
    %v248 = vpack.c.b16 %v239, %v238
    %v249 = vpack.c.b16 %v241, %v240
    %258 = vmatpush.bf16.msra.mxu0 %v249
    %259 = vmatpush.bf16.msra.mxu0 %v248
    %260 = vmatpush.bf16.msra.mxu0 %v247
    %261 = vmatpush.bf16.msra.mxu0 %v246
    %262 = vmatpush.bf16.msra.mxu0 %v245
    %263 = vmatpush.bf16.msra.mxu0 %v244
    %264 = vmatpush.bf16.msra.mxu0 %v243
    %265 = vmatpush.bf16.msra.mxu0 %v242
    %266 = vmatmul.bf16.gmra.mxu0 %v178
    %v267 = vpop.f32.mrf.mxu0
    %v268 = vadd.f32 0.0, %v267
    %v269 = vpop.f32.mrf.mxu0
    %v270 = vadd.f32 0.0, %v269
    %271 = vmatmul.bf16.gmra.mxu0 %v179
    %v272 = vpop.f32.mrf.mxu0
    %v273 = vadd.f32 0.0, %v272
    %v274 = vpop.f32.mrf.mxu0
    %v275 = vadd.f32 0.0, %v274
    %276 = vmatmul.bf16.gmra.mxu0 %v180
    %v277 = vpop.f32.mrf.mxu0
    %v278 = vadd.f32 0.0, %v277
    %v279 = vpop.f32.mrf.mxu0
    %v280 = vadd.f32 0.0, %v279
    %281 = vmatmul.bf16.gmra.mxu0 %v181
    %v282 = vpop.f32.mrf.mxu0
    %v283 = vadd.f32 0.0, %v282
    %v284 = vpop.f32.mrf.mxu0
    %v285 = vadd.f32 0.0, %v284
    %286 = vmatmul.bf16.gmra.mxu0 %v182
    %v287 = vpop.f32.mrf.mxu0
    %v288 = vadd.f32 0.0, %v287
    %v289 = vpop.f32.mrf.mxu0
    %v290 = vadd.f32 0.0, %v289
    %291 = vmatmul.bf16.gmra.mxu0 %v183
    %v292 = vpop.f32.mrf.mxu0
    %v293 = vadd.f32 0.0, %v292
    %v294 = vpop.f32.mrf.mxu0
    %v295 = vadd.f32 0.0, %v294
    %296 = vmatmul.bf16.gmra.mxu0 %v184
    %v297 = vpop.f32.mrf.mxu0
    %v298 = vadd.f32 0.0, %v297
    %v299 = vpop.f32.mrf.mxu0
    %v300 = vadd.f32 0.0, %v299
    %301 = vmatmul.bf16.gmra.mxu0 %v185
    %v302 = vpop.f32.mrf.mxu0
    %v303 = vadd.f32 0.0, %v302
    %v304 = vpop.f32.mrf.mxu0
    %v305 = vadd.f32 0.0, %v304
    %306 = vmatmul.bf16.gmra.mxu0 %v186
    %v307 = vpop.f32.mrf.mxu0
    %v308 = vadd.f32 0.0, %v307
    %v309 = vpop.f32.mrf.mxu0
    %v310 = vadd.f32 0.0, %v309
    %311 = vmatmul.bf16.gmra.mxu0 %v187
    %v312 = vpop.f32.mrf.mxu0
    %v313 = vadd.f32 0.0, %v312
    %v314 = vpop.f32.mrf.mxu0
    %v315 = vadd.f32 0.0, %v314
    %316 = vmatmul.bf16.gmra.mxu0 %v188
    %v317 = vpop.f32.mrf.mxu0
    %v318 = vadd.f32 0.0, %v317
    %v319 = vpop.f32.mrf.mxu0
    %v320 = vadd.f32 0.0, %v319
    %321 = vmatmul.bf16.gmra.mxu0 %v189
    %v322 = vpop.f32.mrf.mxu0
    %v323 = vadd.f32 0.0, %v322
    %v324 = vpop.f32.mrf.mxu0
    %v325 = vadd.f32 0.0, %v324
    %326 = vmatmul.bf16.gmra.mxu0 %v190
    %v327 = vpop.f32.mrf.mxu0
    %v328 = vadd.f32 0.0, %v327
    %v329 = vpop.f32.mrf.mxu0
    %v330 = vadd.f32 0.0, %v329
    %331 = vmatmul.bf16.gmra.mxu0 %v191
    %v332 = vpop.f32.mrf.mxu0
    %v333 = vadd.f32 0.0, %v332
    %v334 = vpop.f32.mrf.mxu0
    %v335 = vadd.f32 0.0, %v334
    %336 = vmatmul.bf16.gmra.mxu0 %v192
    %v337 = vpop.f32.mrf.mxu0
    %v338 = vadd.f32 0.0, %v337
    %v339 = vpop.f32.mrf.mxu0
    %v340 = vadd.f32 0.0, %v339
    %341 = vmatmul.bf16.gmra.mxu0 %v193
    %v342 = vpop.f32.mrf.mxu0
    %v343 = vadd.f32 0.0, %v342
    %v344 = vpop.f32.mrf.mxu0
    %v345 = vadd.f32 0.0, %v344
    %346 = vdwg.mxu0
    %v347 = vld [vmem:[#allocation5] sm:$0x3]
    %v349 = vrot.slane %v347, 1
    %v350 = vperm.slane %v347, 0
    %v351 = vperm.slane %v349, 0
    %v354 = vadd.f32 %v268, %v350
    %v355 = vadd.f32 %v270, %v350
    %v356 = vadd.f32 %v273, %v350
    %v357 = vadd.f32 %v275, %v350
    %v358 = vadd.f32 %v278, %v350
    %v359 = vadd.f32 %v280, %v350
    %v360 = vadd.f32 %v283, %v350
    %v361 = vadd.f32 %v285, %v350
    %v362 = vadd.f32 %v288, %v350
    %v363 = vadd.f32 %v290, %v350
    %v364 = vadd.f32 %v293, %v350
    %v365 = vadd.f32 %v295, %v350
    %v366 = vadd.f32 %v298, %v350
    %v367 = vadd.f32 %v300, %v350
    %v368 = vadd.f32 %v303, %v350
    %v369 = vadd.f32 %v305, %v350
    %v370 = vadd.f32 %v308, %v351
    %v371 = vadd.f32 %v310, %v351
    %v372 = vadd.f32 %v313, %v351
    %v373 = vadd.f32 %v315, %v351
    %v374 = vadd.f32 %v318, %v351
    %v375 = vadd.f32 %v320, %v351
    %v376 = vadd.f32 %v323, %v351
    %v377 = vadd.f32 %v325, %v351
    %v378 = vadd.f32 %v328, %v351
    %v379 = vadd.f32 %v330, %v351
    %v380 = vadd.f32 %v333, %v351
    %v381 = vadd.f32 %v335, %v351
    %v382 = vadd.f32 %v338, %v351
    %v383 = vadd.f32 %v340, %v351
    %v384 = vadd.f32 %v343, %v351
    %v385 = vadd.f32 %v345, %v351
    %v386 = vmax.f32 %v354, 0.0
    %v387 = vmax.f32 %v355, 0.0
    %v388 = vmax.f32 %v356, 0.0
    %v389 = vmax.f32 %v357, 0.0
    %v390 = vmax.f32 %v358, 0.0
    %v391 = vmax.f32 %v359, 0.0
    %v392 = vmax.f32 %v360, 0.0
    %v393 = vmax.f32 %v361, 0.0
    %v394 = vmax.f32 %v362, 0.0
    %v395 = vmax.f32 %v363, 0.0
    %v396 = vmax.f32 %v364, 0.0
    %v397 = vmax.f32 %v365, 0.0
    %v398 = vmax.f32 %v366, 0.0
    %v399 = vmax.f32 %v367, 0.0
    %v400 = vmax.f32 %v368, 0.0
    %v401 = vmax.f32 %v369, 0.0
    %v402 = vmax.f32 %v370, 0.0
    %v403 = vmax.f32 %v371, 0.0
    %v404 = vmax.f32 %v372, 0.0
    %v405 = vmax.f32 %v373, 0.0
    %v406 = vmax.f32 %v374, 0.0
    %v407 = vmax.f32 %v375, 0.0
    %v408 = vmax.f32 %v376, 0.0
    %v409 = vmax.f32 %v377, 0.0
    %v410 = vmax.f32 %v378, 0.0
    %v411 = vmax.f32 %v379, 0.0
    %v412 = vmax.f32 %v380, 0.0
    %v413 = vmax.f32 %v381, 0.0
    %v414 = vmax.f32 %v382, 0.0
    %v415 = vmax.f32 %v383, 0.0
    %v416 = vmax.f32 %v384, 0.0
    %v417 = vmax.f32 %v385, 0.0
    %v418 = vld [vmem:[%s3] sm:$0x1]
    %v420 = vperm.slane %v418, 0
    %v422 = vmul.f32 %v386, %v420
    %v423 = vmul.f32 %v387, %v420
    %v424 = vmul.f32 %v388, %v420
    %v425 = vmul.f32 %v389, %v420
    %v426 = vmul.f32 %v390, %v420
    %v427 = vmul.f32 %v391, %v420
    %v428 = vmul.f32 %v392, %v420
    %v429 = vmul.f32 %v393, %v420
    %v430 = vmul.f32 %v394, %v420
    %v431 = vmul.f32 %v395, %v420
    %v432 = vmul.f32 %v396, %v420
    %v433 = vmul.f32 %v397, %v420
    %v434 = vmul.f32 %v398, %v420
    %v435 = vmul.f32 %v399, %v420
    %v436 = vmul.f32 %v400, %v420
    %v437 = vmul.f32 %v401, %v420
    %v438 = vmul.f32 %v402, %v420
    %v439 = vmul.f32 %v403, %v420
    %v440 = vmul.f32 %v404, %v420
    %v441 = vmul.f32 %v405, %v420
    %v442 = vmul.f32 %v406, %v420
    %v443 = vmul.f32 %v407, %v420
    %v444 = vmul.f32 %v408, %v420
    %v445 = vmul.f32 %v409, %v420
    %v446 = vmul.f32 %v410, %v420
    %v447 = vmul.f32 %v411, %v420
    %v448 = vmul.f32 %v412, %v420
    %v449 = vmul.f32 %v413, %v420
    %v450 = vmul.f32 %v414, %v420
    %v451 = vmul.f32 %v415, %v420
    %v452 = vmul.f32 %v416, %v420
    %v453 = vmul.f32 %v417, %v420
    %454 = vadd.xlane.f32.xlu0 %v422
    %v455 = vpop.xlane.xlu0 %454
    %456 = vadd.xlane.f32.xlu0 %v423
    %v457 = vpop.xlane.xlu0 %456
    %458 = vadd.xlane.f32.xlu0 %v424
    %v459 = vpop.xlane.xlu0 %458
    %460 = vadd.xlane.f32.xlu0 %v425
    %v461 = vpop.xlane.xlu0 %460
    %462 = vadd.xlane.f32.xlu0 %v426
    %v463 = vpop.xlane.xlu0 %462
    %464 = vadd.xlane.f32.xlu0 %v427
    %v465 = vpop.xlane.xlu0 %464
    %466 = vadd.xlane.f32.xlu0 %v428
    %v467 = vpop.xlane.xlu0 %466
    %468 = vadd.xlane.f32.xlu0 %v429
    %v469 = vpop.xlane.xlu0 %468
    %470 = vadd.xlane.f32.xlu0 %v430
    %v471 = vpop.xlane.xlu0 %470
    %472 = vadd.xlane.f32.xlu0 %v431
    %v473 = vpop.xlane.xlu0 %472
    %474 = vadd.xlane.f32.xlu0 %v432
    %v475 = vpop.xlane.xlu0 %474
    %476 = vadd.xlane.f32.xlu0 %v433
    %v477 = vpop.xlane.xlu0 %476
    %478 = vadd.xlane.f32.xlu0 %v434
    %v479 = vpop.xlane.xlu0 %478
    %480 = vadd.xlane.f32.xlu0 %v435
    %v481 = vpop.xlane.xlu0 %480
    %482 = vadd.xlane.f32.xlu0 %v436
    %v483 = vpop.xlane.xlu0 %482
    %484 = vadd.xlane.f32.xlu0 %v437
    %v485 = vpop.xlane.xlu0 %484
    %486 = vadd.xlane.f32.xlu0 %v438
    %v487 = vpop.xlane.xlu0 %486
    %488 = vadd.xlane.f32.xlu0 %v439
    %v489 = vpop.xlane.xlu0 %488
    %490 = vadd.xlane.f32.xlu0 %v440
    %v491 = vpop.xlane.xlu0 %490
    %492 = vadd.xlane.f32.xlu0 %v441
    %v493 = vpop.xlane.xlu0 %492
    %494 = vadd.xlane.f32.xlu0 %v442
    %v495 = vpop.xlane.xlu0 %494
    %496 = vadd.xlane.f32.xlu0 %v443
    %v497 = vpop.xlane.xlu0 %496
    %498 = vadd.xlane.f32.xlu0 %v444
    %v499 = vpop.xlane.xlu0 %498
    %500 = vadd.xlane.f32.xlu0 %v445
    %v501 = vpop.xlane.xlu0 %500
    %502 = vadd.xlane.f32.xlu0 %v446
    %v503 = vpop.xlane.xlu0 %502
    %504 = vadd.xlane.f32.xlu0 %v447
    %v505 = vpop.xlane.xlu0 %504
    %506 = vadd.xlane.f32.xlu0 %v448
    %v507 = vpop.xlane.xlu0 %506
    %508 = vadd.xlane.f32.xlu0 %v449
    %v509 = vpop.xlane.xlu0 %508
    %510 = vadd.xlane.f32.xlu0 %v450
    %v511 = vpop.xlane.xlu0 %510
    %512 = vadd.xlane.f32.xlu0 %v451
    %v513 = vpop.xlane.xlu0 %512
    %514 = vadd.xlane.f32.xlu0 %v452
    %v515 = vpop.xlane.xlu0 %514
    %516 = vadd.xlane.f32.xlu0 %v453
    %v517 = vpop.xlane.xlu0 %516
    %v518 = vlaneseq
    %v519 = vand.u32 %v518, 127
    %vm520 = vcmp.lt.s32.totalorder %v519, 16
    %v553 = vperm.slane %v455, %v519
    %v554 = vadd.s32 %v519, 4294967288
    %v555 = vperm.slane %v457, %v554
    %vm556 = vcmask 130112
    %v557 = vsel %vm556, %v555, %v553
    %v558 = vadd.s32 %v519, 4294967280
    %v559 = vperm.slane %v459, %v558
    %vm560 = vcmask 195712
    %v561 = vsel %vm560, %v559, %v557
    %v562 = vadd.s32 %v519, 4294967272
    %v563 = vperm.slane %v461, %v562
    %vm564 = vcmask 261312
    %v565 = vsel %vm564, %v563, %v561
    %v566 = vadd.s32 %v519, 4294967264
    %v567 = vperm.slane %v463, %v566
    %vm568 = vcmask 326912
    %v569 = vsel %vm568, %v567, %v565
    %v570 = vadd.s32 %v519, 4294967256
    %v571 = vperm.slane %v465, %v570
    %vm572 = vcmask 392512
    %v573 = vsel %vm572, %v571, %v569
    %v574 = vadd.s32 %v519, 4294967248
    %v575 = vperm.slane %v467, %v574
    %vm576 = vcmask 458112
    %v577 = vsel %vm576, %v575, %v573
    %v578 = vadd.s32 %v519, 4294967240
    %v579 = vperm.slane %v469, %v578
    %vm580 = vcmask 523712
    %v581 = vsel %vm580, %v579, %v577
    %v582 = vadd.s32 %v519, 4294967232
    %v583 = vperm.slane %v471, %v582
    %vm584 = vcmask 589312
    %v585 = vsel %vm584, %v583, %v581
    %v586 = vadd.s32 %v519, 4294967224
    %v587 = vperm.slane %v473, %v586
    %vm588 = vcmask 654912
    %v589 = vsel %vm588, %v587, %v585
    %v590 = vadd.s32 %v519, 4294967216
    %v591 = vperm.slane %v475, %v590
    %vm592 = vcmask 720512
    %v593 = vsel %vm592, %v591, %v589
    %v594 = vadd.s32 %v519, 4294967208
    %v595 = vperm.slane %v477, %v594
    %vm596 = vcmask 786112
    %v597 = vsel %vm596, %v595, %v593
    %v598 = vadd.s32 %v519, 4294967200
    %v599 = vperm.slane %v479, %v598
    %vm600 = vcmask 851712
    %v601 = vsel %vm600, %v599, %v597
    %v602 = vadd.s32 %v519, 4294967192
    %v603 = vperm.slane %v481, %v602
    %vm604 = vcmask 917312
    %v605 = vsel %vm604, %v603, %v601
    %v606 = vadd.s32 %v519, 4294967184
    %v607 = vperm.slane %v483, %v606
    %vm608 = vcmask 982912
    %v609 = vsel %vm608, %v607, %v605
    %v610 = vadd.s32 %v519, 4294967176
    %v611 = vperm.slane %v485, %v610
    %vm612 = vcmask 1048512
    %v613 = vsel %vm612, %v611, %v609
    %v614 = vperm.slane %v487, %v519
    %v615 = vperm.slane %v489, %v554
    %v616 = vsel %vm556, %v615, %v614
    %v617 = vperm.slane %v491, %v558
    %v618 = vsel %vm560, %v617, %v616
    %v619 = vperm.slane %v493, %v562
    %v620 = vsel %vm564, %v619, %v618
    %v621 = vperm.slane %v495, %v566
    %v622 = vsel %vm568, %v621, %v620
    %v623 = vperm.slane %v497, %v570
    %v624 = vsel %vm572, %v623, %v622
    %v625 = vperm.slane %v499, %v574
    %v626 = vsel %vm576, %v625, %v624
    %v627 = vperm.slane %v501, %v578
    %v628 = vsel %vm580, %v627, %v626
    %v629 = vperm.slane %v503, %v582
    %v630 = vsel %vm584, %v629, %v628
    %v631 = vperm.slane %v505, %v586
    %v632 = vsel %vm588, %v631, %v630
    %v633 = vperm.slane %v507, %v590
    %v634 = vsel %vm592, %v633, %v632
    %v635 = vperm.slane %v509, %v594
    %v636 = vsel %vm596, %v635, %v634
    %v637 = vperm.slane %v511, %v598
    %v638 = vsel %vm600, %v637, %v636
    %v639 = vperm.slane %v513, %v602
    %v640 = vsel %vm604, %v639, %v638
    %v641 = vperm.slane %v515, %v606
    %v642 = vsel %vm608, %v641, %v640
    %v643 = vperm.slane %v517, %v610
    %v644 = vsel %vm612, %v643, %v642
    %vm645 = vcmask 1041409
    %v646 = vsel %vm645, %v644, %v613
    %v648 = vsel %vm520, %v646, -1e+30
    %vm649 = vcmask 1041408
    %v650 = vsel %vm649, %v648, -inf
    %651 = vmax.xlane.f32.xlu0 %v650
    %v652 = vpop.xlane.xlu0 %651
    %v653 = vsub.f32 %v648, %v652
    %v654 = vmul.f32 %v653, 1.442695
    %v655 = vpow.pop %v654
    %v656 = vsel %vm649, %v655, 0.0
    %657 = vadd.xlane.f32.xlu0 %v656
    %v658 = vpop.xlane.xlu0 %657
    %v659 = vrcp.pop %v658
    %v660 = vmul.f32 %v655, %v659
    %v661 = vperm.slane %v660, 0
    %v662 = vlaneseq
    %v663 = vshrl.u32 %v662, 7
    %665 = vset.pattern.permute.xlu0 %v663
    %666 = vperm.xlu0 %665, %v661
    %v667 = vpop.permute.xlu0 %666
    %v668 = vlaneseq
    %v669 = vshrl.u32 %v668, 7
    %v670 = vadd.s32 %v669, 8
    %671 = vset.pattern.permute.xlu0 %v670
    %672 = vperm.xlu0 %671, %v661
    %v673 = vpop.permute.xlu0 %672
    %v674 = vlaneseq
    %v675 = vshrl.u32 %v674, 7
    %v676 = vadd.s32 %v675, 16
    %677 = vset.pattern.permute.xlu0 %v676
    %678 = vperm.xlu0 %677, %v661
    %v679 = vpop.permute.xlu0 %678
    %v680 = vlaneseq
    %v681 = vshrl.u32 %v680, 7
    %v682 = vadd.s32 %v681, 24
    %683 = vset.pattern.permute.xlu0 %v682
    %684 = vperm.xlu0 %683, %v661
    %v685 = vpop.permute.xlu0 %684
    %v686 = vlaneseq
    %v687 = vshrl.u32 %v686, 7
    %v688 = vadd.s32 %v687, 32
    %689 = vset.pattern.permute.xlu0 %v688
    %690 = vperm.xlu0 %689, %v661
    %v691 = vpop.permute.xlu0 %690
    %v692 = vlaneseq
    %v693 = vshrl.u32 %v692, 7
    %v694 = vadd.s32 %v693, 40
    %695 = vset.pattern.permute.xlu0 %v694
    %696 = vperm.xlu0 %695, %v661
    %v697 = vpop.permute.xlu0 %696
    %v698 = vlaneseq
    %v699 = vshrl.u32 %v698, 7
    %v700 = vadd.s32 %v699, 48
    %701 = vset.pattern.permute.xlu0 %v700
    %702 = vperm.xlu0 %701, %v661
    %v703 = vpop.permute.xlu0 %702
    %v704 = vlaneseq
    %v705 = vshrl.u32 %v704, 7
    %v706 = vadd.s32 %v705, 56
    %707 = vset.pattern.permute.xlu0 %v706
    %708 = vperm.xlu0 %707, %v661
    %v709 = vpop.permute.xlu0 %708
    %v710 = vlaneseq
    %v711 = vshrl.u32 %v710, 7
    %v712 = vadd.s32 %v711, 64
    %713 = vset.pattern.permute.xlu0 %v712
    %714 = vperm.xlu0 %713, %v661
    %v715 = vpop.permute.xlu0 %714
    %v716 = vlaneseq
    %v717 = vshrl.u32 %v716, 7
    %v718 = vadd.s32 %v717, 72
    %719 = vset.pattern.permute.xlu0 %v718
    %720 = vperm.xlu0 %719, %v661
    %v721 = vpop.permute.xlu0 %720
    %v722 = vlaneseq
    %v723 = vshrl.u32 %v722, 7
    %v724 = vadd.s32 %v723, 80
    %725 = vset.pattern.permute.xlu0 %v724
    %726 = vperm.xlu0 %725, %v661
    %v727 = vpop.permute.xlu0 %726
    %v728 = vlaneseq
    %v729 = vshrl.u32 %v728, 7
    %v730 = vadd.s32 %v729, 88
    %731 = vset.pattern.permute.xlu0 %v730
    %732 = vperm.xlu0 %731, %v661
    %v733 = vpop.permute.xlu0 %732
    %v734 = vlaneseq
    %v735 = vshrl.u32 %v734, 7
    %v736 = vadd.s32 %v735, 96
    %737 = vset.pattern.permute.xlu0 %v736
    %738 = vperm.xlu0 %737, %v661
    %v739 = vpop.permute.xlu0 %738
    %v740 = vlaneseq
    %v741 = vshrl.u32 %v740, 7
    %v742 = vadd.s32 %v741, 104
    %743 = vset.pattern.permute.xlu0 %v742
    %744 = vperm.xlu0 %743, %v661
    %v745 = vpop.permute.xlu0 %744
    %v746 = vlaneseq
    %v747 = vshrl.u32 %v746, 7
    %v748 = vadd.s32 %v747, 112
    %749 = vset.pattern.permute.xlu0 %v748
    %750 = vperm.xlu0 %749, %v661
    %v751 = vpop.permute.xlu0 %750
    %v752 = vlaneseq
    %v753 = vshrl.u32 %v752, 7
    %v754 = vadd.s32 %v753, 120
    %755 = vset.pattern.permute.xlu0 %v754
    %756 = vperm.xlu0 %755, %v661
    %v757 = vpop.permute.xlu0 %756
    %v758 = vperm.slane %v660, 1
    %v759 = vlaneseq
    %v760 = vshrl.u32 %v759, 7
    %762 = vset.pattern.permute.xlu0 %v760
    %763 = vperm.xlu0 %762, %v758
    %v764 = vpop.permute.xlu0 %763
    %v765 = vlaneseq
    %v766 = vshrl.u32 %v765, 7
    %v767 = vadd.s32 %v766, 8
    %768 = vset.pattern.permute.xlu0 %v767
    %769 = vperm.xlu0 %768, %v758
    %v770 = vpop.permute.xlu0 %769
    %v771 = vlaneseq
    %v772 = vshrl.u32 %v771, 7
    %v773 = vadd.s32 %v772, 16
    %774 = vset.pattern.permute.xlu0 %v773
    %775 = vperm.xlu0 %774, %v758
    %v776 = vpop.permute.xlu0 %775
    %v777 = vlaneseq
    %v778 = vshrl.u32 %v777, 7
    %v779 = vadd.s32 %v778, 24
    %780 = vset.pattern.permute.xlu0 %v779
    %781 = vperm.xlu0 %780, %v758
    %v782 = vpop.permute.xlu0 %781
    %v783 = vlaneseq
    %v784 = vshrl.u32 %v783, 7
    %v785 = vadd.s32 %v784, 32
    %786 = vset.pattern.permute.xlu0 %v785
    %787 = vperm.xlu0 %786, %v758
    %v788 = vpop.permute.xlu0 %787
    %v789 = vlaneseq
    %v790 = vshrl.u32 %v789, 7
    %v791 = vadd.s32 %v790, 40
    %792 = vset.pattern.permute.xlu0 %v791
    %793 = vperm.xlu0 %792, %v758
    %v794 = vpop.permute.xlu0 %793
    %v795 = vlaneseq
    %v796 = vshrl.u32 %v795, 7
    %v797 = vadd.s32 %v796, 48
    %798 = vset.pattern.permute.xlu0 %v797
    %799 = vperm.xlu0 %798, %v758
    %v800 = vpop.permute.xlu0 %799
    %v801 = vlaneseq
    %v802 = vshrl.u32 %v801, 7
    %v803 = vadd.s32 %v802, 56
    %804 = vset.pattern.permute.xlu0 %v803
    %805 = vperm.xlu0 %804, %v758
    %v806 = vpop.permute.xlu0 %805
    %v807 = vlaneseq
    %v808 = vshrl.u32 %v807, 7
    %v809 = vadd.s32 %v808, 64
    %810 = vset.pattern.permute.xlu0 %v809
    %811 = vperm.xlu0 %810, %v758
    %v812 = vpop.permute.xlu0 %811
    %v813 = vlaneseq
    %v814 = vshrl.u32 %v813, 7
    %v815 = vadd.s32 %v814, 72
    %816 = vset.pattern.permute.xlu0 %v815
    %817 = vperm.xlu0 %816, %v758
    %v818 = vpop.permute.xlu0 %817
    %v819 = vlaneseq
    %v820 = vshrl.u32 %v819, 7
    %v821 = vadd.s32 %v820, 80
    %822 = vset.pattern.permute.xlu0 %v821
    %823 = vperm.xlu0 %822, %v758
    %v824 = vpop.permute.xlu0 %823
    %v825 = vlaneseq
    %v826 = vshrl.u32 %v825, 7
    %v827 = vadd.s32 %v826, 88
    %828 = vset.pattern.permute.xlu0 %v827
    %829 = vperm.xlu0 %828, %v758
    %v830 = vpop.permute.xlu0 %829
    %v831 = vlaneseq
    %v832 = vshrl.u32 %v831, 7
    %v833 = vadd.s32 %v832, 96
    %834 = vset.pattern.permute.xlu0 %v833
    %835 = vperm.xlu0 %834, %v758
    %v836 = vpop.permute.xlu0 %835
    %v837 = vlaneseq
    %v838 = vshrl.u32 %v837, 7
    %v839 = vadd.s32 %v838, 104
    %840 = vset.pattern.permute.xlu0 %v839
    %841 = vperm.xlu0 %840, %v758
    %v842 = vpop.permute.xlu0 %841
    %v843 = vlaneseq
    %v844 = vshrl.u32 %v843, 7
    %v845 = vadd.s32 %v844, 112
    %846 = vset.pattern.permute.xlu0 %v845
    %847 = vperm.xlu0 %846, %v758
    %v848 = vpop.permute.xlu0 %847
    %v849 = vlaneseq
    %v850 = vshrl.u32 %v849, 7
    %v851 = vadd.s32 %v850, 120
    %852 = vset.pattern.permute.xlu0 %v851
    %853 = vperm.xlu0 %852, %v758
    %v854 = vpop.permute.xlu0 %853
    %v855 = vunpack.c.l.bf16 %v66
    %v856 = vunpack.c.l.bf16 %v67
    %v857 = vunpack.c.l.bf16 %v68
    %v858 = vunpack.c.l.bf16 %v69
    %v859 = vunpack.c.l.bf16 %v70
    %v860 = vunpack.c.l.bf16 %v71
    %v861 = vunpack.c.l.bf16 %v72
    %v862 = vunpack.c.l.bf16 %v73
    %v863 = vunpack.c.l.bf16 %v74
    %v864 = vunpack.c.l.bf16 %v75
    %v865 = vunpack.c.l.bf16 %v76
    %v866 = vunpack.c.l.bf16 %v77
    %v867 = vunpack.c.l.bf16 %v78
    %v868 = vunpack.c.l.bf16 %v79
    %v869 = vunpack.c.l.bf16 %v80
    %v870 = vunpack.c.l.bf16 %v81
    %v871 = vunpack.c.l.bf16 %v82
    %v872 = vunpack.c.l.bf16 %v83
    %v873 = vunpack.c.l.bf16 %v84
    %v874 = vunpack.c.l.bf16 %v85
    %v875 = vunpack.c.l.bf16 %v86
    %v876 = vunpack.c.l.bf16 %v87
    %v877 = vunpack.c.l.bf16 %v88
    %v878 = vunpack.c.l.bf16 %v89
    %v879 = vunpack.c.l.bf16 %v90
    %v880 = vunpack.c.l.bf16 %v91
    %v881 = vunpack.c.l.bf16 %v92
    %v882 = vunpack.c.l.bf16 %v93
    %v883 = vunpack.c.l.bf16 %v94
    %v884 = vunpack.c.l.bf16 %v95
    %v885 = vunpack.c.l.bf16 %v96
    %v886 = vunpack.c.l.bf16 %v97
    %v887 = vmul.f32 %v855, %v667
    %v888 = vmul.f32 %v856, %v673
    %v889 = vmul.f32 %v857, %v679
    %v890 = vmul.f32 %v858, %v685
    %v891 = vmul.f32 %v859, %v691
    %v892 = vmul.f32 %v860, %v697
    %v893 = vmul.f32 %v861, %v703
    %v894 = vmul.f32 %v862, %v709
    %v895 = vmul.f32 %v863, %v715
    %v896 = vmul.f32 %v864, %v721
    %v897 = vmul.f32 %v865, %v727
    %v898 = vmul.f32 %v866, %v733
    %v899 = vmul.f32 %v867, %v739
    %v900 = vmul.f32 %v868, %v745
    %v901 = vmul.f32 %v869, %v751
    %v902 = vmul.f32 %v870, %v757
    %v903 = vmul.f32 %v871, %v764
    %v904 = vmul.f32 %v872, %v770
    %v905 = vmul.f32 %v873, %v776
    %v906 = vmul.f32 %v874, %v782
    %v907 = vmul.f32 %v875, %v788
    %v908 = vmul.f32 %v876, %v794
    %v909 = vmul.f32 %v877, %v800
    %v910 = vmul.f32 %v878, %v806
    %v911 = vmul.f32 %v879, %v812
    %v912 = vmul.f32 %v880, %v818
    %v913 = vmul.f32 %v881, %v824
    %v914 = vmul.f32 %v882, %v830
    %v915 = vmul.f32 %v883, %v836
    %v916 = vmul.f32 %v884, %v842
    %v917 = vmul.f32 %v885, %v848
    %v918 = vmul.f32 %v886, %v854
    %v919 = vadd.f32 %v887, %v888
    %v920 = vadd.f32 %v919, %v889
    %v921 = vadd.f32 %v920, %v890
    %v922 = vadd.f32 %v921, %v891
    %v923 = vadd.f32 %v922, %v892
    %v924 = vadd.f32 %v923, %v893
    %v925 = vadd.f32 %v924, %v894
    %v926 = vadd.f32 %v925, %v895
    %v927 = vadd.f32 %v926, %v896
    %v928 = vadd.f32 %v927, %v897
    %v929 = vadd.f32 %v928, %v898
    %v930 = vadd.f32 %v929, %v899
    %v931 = vadd.f32 %v930, %v900
    %v932 = vadd.f32 %v931, %v901
    %v933 = vadd.f32 %v932, %v902
    %v934 = vrot.slane %v933, 4
    %v935 = vadd.f32 %v933, %v934
    %v936 = vrot.slane %v935, 2
    %v937 = vadd.f32 %v935, %v936
    %v938 = vrot.slane %v937, 1
    %v939 = vadd.f32 %v937, %v938
    %v940 = vadd.f32 %v903, %v904
    %v941 = vadd.f32 %v940, %v905
    %v942 = vadd.f32 %v941, %v906
    %v943 = vadd.f32 %v942, %v907
    %v944 = vadd.f32 %v943, %v908
    %v945 = vadd.f32 %v944, %v909
    %v946 = vadd.f32 %v945, %v910
    %v947 = vadd.f32 %v946, %v911
    %v948 = vadd.f32 %v947, %v912
    %v949 = vadd.f32 %v948, %v913
    %v950 = vadd.f32 %v949, %v914
    %v951 = vadd.f32 %v950, %v915
    %v952 = vadd.f32 %v951, %v916
    %v953 = vadd.f32 %v952, %v917
    %v954 = vadd.f32 %v953, %v918
    %v955 = vrot.slane %v954, 4
    %v956 = vadd.f32 %v954, %v955
    %v957 = vrot.slane %v956, 2
    %v958 = vadd.f32 %v956, %v957
    %v959 = vrot.slane %v958, 1
    %v960 = vadd.f32 %v958, %v959
    %v963 = vsel %vm645, %v960, %v939
    %965 = vst [vmem:[#allocation8] sm:$0x3] %v963
    %966 = vst [vmem:[#allocation9] sm:$0x3] %v660
    // Predicated region
    $region30: #{tpu_custom_call.1} parent=1 // pred_check
      _
    $region31: #{tpu_custom_call.1} parent=1 // pred_check_branch
      %968 = sbr.rel (0) target = $region33
    $region32: #{tpu_custom_call.1} parent=1 // pred_region
      %970 = vsyncadd [#allocation4], 0
      %s972 = sshll.u32 [#allocation8], 4
      %s973 = int_to_ptr.vmem [resolvable:$true] %s972
      %s974 = sshll.u32 %s4, 4
      %s975 = int_to_ptr.hbm [resolvable:$true] %s974
      %977 = dma.vmem_to_hbm [thread:$0]  %s973, 32, %s975, [#allocation4]
    $region33: #{tpu_custom_call.1} parent=1 // pred_fallthru
      _
    // Predicated region
    $region34: #{tpu_custom_call.1} parent=1 // pred_check
      _
    $region35: #{tpu_custom_call.1} parent=1 // pred_check_branch
      %979 = sbr.rel (0) target = $region37
    $region36: #{tpu_custom_call.1} parent=1 // pred_region
      %981 = vsyncadd [#allocation10], 0
      %s983 = sshll.u32 [#allocation9], 4
      %s984 = int_to_ptr.vmem [resolvable:$true] %s983
      %s985 = sshll.u32 %s5, 4
      %s986 = int_to_ptr.hbm [resolvable:$true] %s985
      %988 = dma.vmem_to_hbm [thread:$0]  %s984, 32, %s986, [#allocation10]
    $region37: #{tpu_custom_call.1} parent=1 // pred_fallthru
      _
    // Predicated region
    $region38: #{tpu_custom_call.1} parent=1 // pred_check
      _
    $region39: #{tpu_custom_call.1} parent=1 // pred_check_branch
      %990 = sbr.rel (0) target = $region41
    $region40: #{tpu_custom_call.1} parent=1 // pred_region
      %992 = dma.done [#allocation4], 32
    $region41: #{tpu_custom_call.1} parent=1 // pred_fallthru
      _
    // Predicated region
    $region42: #{tpu_custom_call.1} parent=1 // pred_check
      _
    $region43: #{tpu_custom_call.1} parent=1 // pred_check_branch
      %994 = sbr.rel (0) target = $region45
    $region44: #{tpu_custom_call.1} parent=1 // pred_region
      %996 = dma.done [#allocation10], 32
    $region45: #{tpu_custom_call.1} parent=1 // pred_fallthru
      _
    %997 = vsyncpa [#allocation3], 1
    %998 = vsyncpa [#allocation6], 1
    %999 = vsyncpa [#allocation4], 1
    %1000 = vsyncpa [#allocation10], 1

</llo_original>
